<compile_context>
chip_gen: v7x
topology: tpu7x:2x2x1
jax: 0.10.0
libtpu: 0.0.40
codegen_flags: <defaults>
</compile_context>

<pallas_src>
import math

import jax
import jax.numpy as jnp
from jax.experimental import pallas as pl
from jax.experimental.pallas import tpu as pltpu

_MIB = 1024 * 1024


# ----------------------------------------------------------------------------
# Pallas kernels
# ----------------------------------------------------------------------------
def _precompute_h_kernel(gamma_ref, miu_ref, sigma_ref, hmu_ref, hsig_ref):
    """H_mu = miu * exp(-gamma*sigma); H_sig = sigma * exp(-gamma*sigma)^2.

    Runs once over (N, Fin) row tiles so exp (EUP) and the VPU multiplies are
    not repeated for every adjacency row panel of the main kernel.  Outputs are
    written in the matmul dtype (bf16 by default), halving the feature-stream
    HBM traffic of the main kernel.
    """
    gamma = gamma_ref[0]                      # scalar from SMEM (no retrace per gamma)
    sigma = sigma_ref[...]                    # (bm, Fin) f32
    att = jnp.exp(-gamma * sigma)             # f32 elementwise (EUP)
    hmu_ref[...] = (miu_ref[...] * att).astype(hmu_ref.dtype)
    hsig_ref[...] = (sigma * att * att).astype(hsig_ref.dtype)


def _agg_transform_kernel(adj1_ref, adj2_ref, hmu_ref, hsig_ref,
                          wmu_ref, wsig_ref, m_ref, s_ref,
                          accmu_ref, accsig_ref):
    """K-tiled graph aggregation + feature transform.

    grid = (row tiles i [parallel], contraction tiles k over N [arbitrary]):
      acc_mu[i]  += adj1[i,k] @ H_mu[k]     (f32 accumulate in VMEM scratch)
      acc_sig[i] += adj2[i,k] @ H_sig[k]
      last k:     M[i]     = acc_mu[i]  @ W_miu
                  Sigma[i] = acc_sig[i] @ W_sigma

    Adjacency panels arrive as f32 straight from HBM (no wrapper-side cast) and
    are converted to the MXU dtype in-VMEM right before jnp.dot.
    """
    k = pl.program_id(1)

    @pl.when(k == 0)
    def _init():
        accmu_ref[...] = jnp.zeros_like(accmu_ref)
        accsig_ref[...] = jnp.zeros_like(accsig_ref)

    mm_dtype = hmu_ref.dtype
    accmu_ref[...] += jnp.dot(adj1_ref[...].astype(mm_dtype), hmu_ref[...],
                              preferred_element_type=jnp.float32)
    accsig_ref[...] += jnp.dot(adj2_ref[...].astype(mm_dtype), hsig_ref[...],
                               preferred_element_type=jnp.float32)

    @pl.when(k == pl.num_programs(1) - 1)
    def _finalize():
        m_ref[...] = jnp.dot(accmu_ref[...].astype(wmu_ref.dtype), wmu_ref[...],
                             preferred_element_type=jnp.float32)
        s_ref[...] = jnp.dot(accsig_ref[...].astype(wsig_ref.dtype), wsig_ref[...],
                             preferred_element_type=jnp.float32)


def _linear_kernel(x_ref, w_ref, o_ref):
    """No-adjacency branch of the module: out = x @ W (returned twice)."""
    o_ref[...] = jnp.dot(x_ref[...].astype(w_ref.dtype), w_ref[...],
                         preferred_element_type=jnp.float32)


# ----------------------------------------------------------------------------
# Wrapper helpers
# ----------------------------------------------------------------------------
def _round_up(x, m):
    return ((x + m - 1) // m) * m


def _pick_block(n, target, align):
    """Largest divisor of n that is a multiple of `align` and <= target.

    Falls back to n (one full block, always legal for the TPU tiling rules)
    only when no aligned divisor exists.
    """
    if n <= target:
        return n
    b = (min(target, n) // align) * align
    while b >= align:
        if n % b == 0:
            return b
        b -= align
    return n


def _vmem_limit(est_bytes):
    # Floor at the common default scoped limit; cap below the smallest physical
    # per-core VMEM across generations (v7x: 64 MiB).
    return int(min(64 * _MIB, max(16 * _MIB, est_bytes * 3 // 2 + 4 * _MIB)))


# ----------------------------------------------------------------------------
# Forward wrapper
# ----------------------------------------------------------------------------
def gaussian_convolution(previous_miu, previous_sigma, weight_miu, weight_sigma,
                         adj_norm1=None, adj_norm2=None, gamma=1.0, *,
                         block_rows=256, block_k=512, use_bf16_matmul=True):
    """Forward of the PyTorch GaussianConvolution module.

    use_bf16_matmul=True streams the f32 adjacency and casts MXU operands to
    bf16 in-VMEM (f32 accumulation, ~0.4% relative error per matmul).  Set
    False for a full-f32 MXU path when numerical parity matters.
    """
    n, fin = previous_miu.shape
    fout = weight_miu.shape[1]
    mm_dtype = jnp.bfloat16 if use_bf16_matmul else jnp.float32
    mm_bytes = 2 if use_bf16_matmul else 4

    # Lane-dense outputs: pad weight output dim to a multiple of 128 lanes.
    # TODO(synk): cache the padded/cast weights (and bf16 H) across repeated
    # calls with the same parameters; left to the caller here (O(Fin*Fout)).
    fout_pad = _round_up(fout, 128)
    pad = fout_pad - fout
    wmu = jnp.pad(weight_miu, ((0, 0), (0, pad))).astype(mm_dtype)
    wsig = jnp.pad(weight_sigma, ((0, 0), (0, pad))).astype(mm_dtype)

    # ---- no-adjacency branch: (miu @ W_miu, miu @ W_miu) ---------------------
    if adj_norm1 is None and adj_norm2 is None:
        bm = _pick_block(n, block_rows, 8)
        est = (2 * bm * fin * 4 + 2 * fin * fout_pad * mm_bytes
               + 2 * bm * fout_pad * 4)
        out = pl.pallas_call(
            _linear_kernel,
            out_shape=jax.ShapeDtypeStruct((n, fout_pad), jnp.float32),
            grid=(n // bm,),
            in_specs=[pl.BlockSpec((bm, fin), lambda i: (i, 0)),
                      pl.BlockSpec((fin, fout_pad), lambda i: (0, 0))],
            out_specs=pl.BlockSpec((bm, fout_pad), lambda i: (i, 0)),
            compiler_params=pltpu.CompilerParams(
                dimension_semantics=("parallel",),
                vmem_limit_bytes=_vmem_limit(est)),
        )(previous_miu, wmu)
        if pad:
            out = out[:, :fout]
        return out, out

    # ---- 1) elementwise precompute, once, written to HBM in mm_dtype --------
    bm_pre = _pick_block(n, 512, 8)
    gamma_arr = jnp.asarray([gamma], dtype=jnp.float32)
    est_pre = 2 * 2 * bm_pre * fin * 4 + 2 * 2 * bm_pre * fin * mm_bytes
    hmu, hsig = pl.pallas_call(
        _precompute_h_kernel,
        out_shape=(jax.ShapeDtypeStruct((n, fin), mm_dtype),
                   jax.ShapeDtypeStruct((n, fin), mm_dtype)),
        grid=(n // bm_pre,),
        in_specs=[pl.BlockSpec(memory_space=pltpu.MemorySpace.SMEM),   # gamma
                  pl.BlockSpec((bm_pre, fin), lambda i: (i, 0)),       # miu
                  pl.BlockSpec((bm_pre, fin), lambda i: (i, 0))],      # sigma
        out_specs=(pl.BlockSpec((bm_pre, fin), lambda i: (i, 0)),
                   pl.BlockSpec((bm_pre, fin), lambda i: (i, 0))),
        compiler_params=pltpu.CompilerParams(
            dimension_semantics=("parallel",),
            vmem_limit_bytes=_vmem_limit(est_pre)),
    )(gamma_arr, previous_miu, previous_sigma)

    # ---- 2) adj-streaming aggregation + feature transform (K-tiled) ---------
    bm = _pick_block(n, block_rows, 8)      # output row tile (M dim of the MXU)
    tk = _pick_block(n, block_k, 128)       # contraction tile over N (lane dim of adj)
    est = (2 * 2 * bm * tk * 4              # 2 adj panels, double-buffered, f32
           + 2 * 2 * tk * fin * mm_bytes    # 2 H panels, double-buffered
           + 2 * 2 * fin * fout_pad * mm_bytes   # 2 weights (small, invariant)
           + 2 * 2 * bm * fout_pad * 4      # 2 outputs, double-buffered, f32
           + 2 * bm * fout_pad * 4)         # 2 f32 accumulators (scratch)
    m_pad, s_pad = pl.pallas_call(
        _agg_transform_kernel,
        out_shape=(jax.ShapeDtypeStruct((n, fout_pad), jnp.float32),
                   jax.ShapeDtypeStruct((n, fout_pad), jnp.float32)),
        grid=(n // bm, n // tk),
        in_specs=[
            pl.BlockSpec((bm, tk), lambda i, k: (i, k)),         # adj_norm1 (f32)
            pl.BlockSpec((bm, tk), lambda i, k: (i, k)),         # adj_norm2 (f32)
            pl.BlockSpec((tk, fin), lambda i, k: (k, 0)),        # H_mu
            pl.BlockSpec((tk, fin), lambda i, k: (k, 0)),        # H_sig
            pl.BlockSpec((fin, fout_pad), lambda i, k: (0, 0)),  # W_miu   (padded)
            pl.BlockSpec((fin, fout_pad), lambda i, k: (0, 0)),  # W_sigma (padded)
        ],
        out_specs=(pl.BlockSpec((bm, fout_pad), lambda i, k: (i, 0)),
                   pl.BlockSpec((bm, fout_pad), lambda i, k: (i, 0))),
        scratch_shapes=[pltpu.VMEM((bm, fout_pad), jnp.float32),
                        pltpu.VMEM((bm, fout_pad), jnp.float32)],
        compiler_params=pltpu.CompilerParams(
            dimension_semantics=("parallel", "arbitrary"),
            vmem_limit_bytes=_vmem_limit(est)),
    )(adj_norm1, adj_norm2, hmu, hsig, wmu, wsig)

    if pad:
        return m_pad[:, :fout], s_pad[:, :fout]
    return m_pad, s_pad


# ----------------------------------------------------------------------------
# Plain-JAX glue (example-input construction only)
# ----------------------------------------------------------------------------
def xavier_uniform(key, shape):
    fan_in, fan_out = shape
    bound = math.sqrt(6.0 / (fan_in + fan_out))
    return jax.random.uniform(key, shape, jnp.float32, -bound, bound)


def normalize_adj(adj, power):
    n = adj.shape[0]
    a = adj + jnp.eye(n, dtype=adj.dtype)
    d = jnp.sum(a, axis=1) ** power
    d = jnp.where(jnp.isinf(d), 0.0, d)
    return (a * d[:, None]) * d[None, :]


# ----------------------------------------------------------------------------
if __name__ == "__main__":
    nnodes, in_features, out_features = 256, 128, 32
    gamma = 1.0

    key = jax.random.PRNGKey(0)
    k_miu, k_sig, k_adj, k_wm, k_ws = jax.random.split(key, 5)

    previous_miu = jax.random.normal(k_miu, (nnodes, in_features), jnp.float32)
    previous_sigma = jax.random.uniform(k_sig, (nnodes, in_features), jnp.float32)

    a = (jax.random.uniform(k_adj, (nnodes, nnodes)) > 0.9).astype(jnp.float32)
    adj = jnp.maximum(a, a.T) * (1.0 - jnp.eye(nnodes, dtype=jnp.float32))
    adj_norm1 = normalize_adj(adj, -0.5)
    adj_norm2 = normalize_adj(adj, -1.0)

    weight_miu = xavier_uniform(k_wm, (in_features, out_features))
    weight_sigma = xavier_uniform(k_ws, (in_features, out_features))

    # Main path: precompute kernel (grid (1,)) + K-tiled aggregation/transform
    # kernel (grid (2 row tiles, 2 contraction tiles) with 128x128 blocks).
    m, s = gaussian_convolution(previous_miu, previous_sigma, weight_miu,
                                weight_sigma, adj_norm1, adj_norm2, gamma,
                                block_rows=128, block_k=128)
    m, s = jax.block_until_ready((m, s))

    assert m.shape == (nnodes, out_features) and s.shape == (nnodes, out_features)
    assert bool(jnp.all(jnp.isfinite(m))) and bool(jnp.all(jnp.isfinite(s)))

    # pure-JAX f32 reference (tolerance allows bf16 MXU operands)
    att = jnp.exp(-gamma * previous_sigma)
    m_ref = adj_norm1 @ (previous_miu * att) @ weight_miu
    s_ref = adj_norm2 @ (previous_sigma * att * att) @ weight_sigma
    assert bool(jnp.allclose(m, m_ref, rtol=5e-2, atol=5e-2)), "miu path mismatch"
    assert bool(jnp.allclose(s, s_ref, rtol=5e-2, atol=5e-2)), "sigma path mismatch"

    # No-adjacency branch of the module: returns (miu @ W_miu, miu @ W_miu).
    m2, s2 = gaussian_convolution(previous_miu, previous_sigma, weight_miu,
                                  weight_sigma, None, None, gamma,
                                  block_rows=128)
    m2, s2 = jax.block_until_ready((m2, s2))
    assert bool(jnp.allclose(m2, previous_miu @ weight_miu, rtol=5e-2, atol=5e-2))
    assert bool(jnp.allclose(s2, m2))

    print("KERNEL_OK")
</pallas_src>

<mosaic_0001>
module attributes {stable_mosaic.version = 11 : i64} {
  func.func @_precompute_h_kernel(%arg0: i32, %arg1: memref<1xf32, #tpu.memory_space<smem>>, %arg2: memref<256x128xf32, #tpu.memory_space<vmem>>, %arg3: memref<256x128xf32, #tpu.memory_space<vmem>>, %arg4: memref<256x128xbf16, #tpu.memory_space<vmem>>, %arg5: memref<256x128xbf16, #tpu.memory_space<vmem>>) attributes {dimension_semantics = [#tpu.dimension_semantics<parallel>], iteration_bounds = array<i64: 1>, scalar_prefetch = 0 : i64, scratch_operands = 0 : i64, tpu.core_type = #tpu.core_type<tc>, window_params = [{transform_indices = @transform_0, window_bounds = array<i64: 1>}, {transform_indices = @transform_1, window_bounds = array<i64: 256, 128>}, {transform_indices = @transform_2, window_bounds = array<i64: 256, 128>}, {transform_indices = @transform_3, window_bounds = array<i64: 256, 128>}, {transform_indices = @transform_4, window_bounds = array<i64: 256, 128>}]} {
    %c0 = arith.constant 0 : index
    %0 = memref.load %arg1[%c0] : memref<1xf32, #tpu.memory_space<smem>>
    %c0_0 = arith.constant 0 : index
    %c0_1 = arith.constant 0 : index
    %1 = vector.load %arg3[%c0_0, %c0_1] : memref<256x128xf32, #tpu.memory_space<vmem>>, vector<256x128xf32>
    %cst = arith.constant 0.000000e+00 : f32
    %2 = arith.subf %cst, %0 : f32
    %3 = vector.broadcast %2 : f32 to vector<256x128xf32>
    %4 = arith.mulf %3, %1 : vector<256x128xf32>
    %5 = math.exp %4 : vector<256x128xf32>
    %c0_2 = arith.constant 0 : index
    %c0_3 = arith.constant 0 : index
    %6 = vector.load %arg2[%c0_2, %c0_3] : memref<256x128xf32, #tpu.memory_space<vmem>>, vector<256x128xf32>
    %7 = arith.mulf %6, %5 : vector<256x128xf32>
    %8 = arith.truncf %7 : vector<256x128xf32> to vector<256x128xbf16>
    %c0_4 = arith.constant 0 : index
    %c0_5 = arith.constant 0 : index
    %9 = vector.load %arg4[%c0_4, %c0_5] : memref<256x128xbf16, #tpu.memory_space<vmem>>, vector<256x128xbf16>
    tpu.vector_store %arg4[%c0_4, %c0_5], %8 {strides = array<i32>} : memref<256x128xbf16, #tpu.memory_space<vmem>>, vector<256x128xbf16>,
    %10 = arith.mulf %1, %5 : vector<256x128xf32>
    %11 = arith.mulf %10, %5 : vector<256x128xf32>
    %12 = arith.truncf %11 : vector<256x128xf32> to vector<256x128xbf16>
    %c0_6 = arith.constant 0 : index
    %c0_7 = arith.constant 0 : index
    %13 = vector.load %arg5[%c0_6, %c0_7] : memref<256x128xbf16, #tpu.memory_space<vmem>>, vector<256x128xbf16>
    tpu.vector_store %arg5[%c0_6, %c0_7], %12 {strides = array<i32>} : memref<256x128xbf16, #tpu.memory_space<vmem>>, vector<256x128xbf16>,
    return
  }
  func.func @transform_0(%arg0: i32) -> i32 {
    %c0_i32 = arith.constant 0 : i32
    %c0_i32_0 = arith.constant 0 : i32
    return %c0_i32 : i32
  }
  func.func @transform_1(%arg0: i32) -> (i32, i32) {
    %c0_i32 = arith.constant 0 : i32
    %c0_i32_0 = arith.constant 0 : i32
    return %arg0, %c0_i32 : i32, i32
  }
  func.func @transform_2(%arg0: i32) -> (i32, i32) {
    %c0_i32 = arith.constant 0 : i32
    %c0_i32_0 = arith.constant 0 : i32
    return %arg0, %c0_i32 : i32, i32
  }
  func.func @transform_3(%arg0: i32) -> (i32, i32) {
    %c0_i32 = arith.constant 0 : i32
    %c0_i32_0 = arith.constant 0 : i32
    return %arg0, %c0_i32 : i32, i32
  }
  func.func @transform_4(%arg0: i32) -> (i32, i32) {
    %c0_i32 = arith.constant 0 : i32
    %c0_i32_0 = arith.constant 0 : i32
    return %arg0, %c0_i32 : i32, i32
  }
}

</mosaic_0001>

<llo_original>
// kernel: tpu_custom_call.1
$region0: #{tpu_custom_call.1}
  #allocation0 [shape = 'u32[]', space=smem, size = 0x4, offset = 0x4, fixed_abs, tag = 'smem constant byte address 0x4 - core index']
  #allocation1 [shape = 'u32[144,128]{1,0:T(1,128)}', space=vmem, size = 0x12000, scoped, tag = 'internal scratch']
  #allocation2 [shape = 'f32[1]{0:T(128)S(6)}', space=smem, size = 0x200, scoped, tag = 'scoped memory for tpu_custom_call.1']
  %s0 = inlined_call_operand.<no memory space> [shape: f32[1], index: 0, kind: input, shape index: {}]
  %s1 = inlined_call_operand.hbm [shape: f32[256,128], index: 1, kind: input, shape index: {}]
  %s2 = inlined_call_operand.hbm [shape: f32[256,128], index: 2, kind: input, shape index: {}]
  %s3 = inlined_call_operand.hbm [shape: bf16[256,128], index: 3, kind: output, shape index: {0}]
  %s4 = inlined_call_operand.hbm [shape: bf16[256,128], index: 4, kind: output, shape index: {1}]
  %5 = xla_tuple %s3, %s4
  %s6 = sld [smem:[#allocation0]]
  $region38: #{tpu_custom_call.1} parent=0
    _
  %s8 = ssub.s32 1, %s6
  %s9 = scalar_select 0, %s8, %s6
  %10 = sst [smem:[#allocation2]] %s0
  $region1: #{tpu_custom_call.1} parent=0
    #allocation3 [shape = 'u8[131072]{0}', space=vmem, size = 0x20000, scoped, tag = 'input window, operand 1, single buffered']
    #allocation4 [shape = 's32[1]{0}', space=sflag, size = 0x4, scoped, tag = 'scoped memory for tpu_custom_call.1']
    #allocation5 [shape = 's32[1]{0}', space=sflag, size = 0x4, scoped, tag = 'scoped memory for tpu_custom_call.1']
    #allocation6 [shape = 'u8[131072]{0}', space=vmem, size = 0x20000, scoped, tag = 'input window, operand 2, single buffered']
    #allocation7 [shape = 's32[1]{0}', space=sflag, size = 0x4, scoped, tag = 'scoped memory for tpu_custom_call.1']
    #allocation8 [shape = 'u8[65536]{0}', space=vmem, size = 0x10000, scoped, tag = 'output window, operand 0, single buffered']
    #allocation9 [shape = 'u8[65536]{0}', space=vmem, size = 0x10000, scoped, tag = 'output window, operand 1, single buffered']
    #allocation10 [shape = 's32[1]{0}', space=sflag, size = 0x4, scoped, tag = 'scoped memory for tpu_custom_call.1']
    %11 = vsyncpa [#allocation4], 0
    %12 = vsyncpa [#allocation7], 0
    %13 = vsyncpa [#allocation5], 0
    %14 = vsyncpa [#allocation10], 0
    // Predicated region
    $region2: #{tpu_custom_call.1} parent=1 // pred_check
      _
    $region3: #{tpu_custom_call.1} parent=1 // pred_check_branch
      %16 = sbr.rel (0) target = $region5
    $region4: #{tpu_custom_call.1} parent=1 // pred_region
      _
    $region5: #{tpu_custom_call.1} parent=1 // pred_fallthru
      _
    // Predicated region
    $region6: #{tpu_custom_call.1} parent=1 // pred_check
      _
    $region7: #{tpu_custom_call.1} parent=1 // pred_check_branch
      %18 = sbr.rel (0) target = $region9
    $region8: #{tpu_custom_call.1} parent=1 // pred_region
      %s20 = ssub.s32 4096, 4096
      %21 = vsyncadd [#allocation4], %s20
      %s22 = sshll.u32 [#allocation3], 4
      %s23 = int_to_ptr.vmem [resolvable:$true] %s22
      %28 = dma.hbm_to_vmem [thread:$0]  %s1, 4096, %s23, [#allocation4], 128, 128, 8
    $region9: #{tpu_custom_call.1} parent=1 // pred_fallthru
      _
    // Predicated region
    $region10: #{tpu_custom_call.1} parent=1 // pred_check
      _
    $region11: #{tpu_custom_call.1} parent=1 // pred_check_branch
      %30 = sbr.rel (0) target = $region13
    $region12: #{tpu_custom_call.1} parent=1 // pred_region
      %s32 = ssub.s32 4096, 4096
      %33 = vsyncadd [#allocation7], %s32
      %s34 = sshll.u32 [#allocation6], 4
      %s35 = int_to_ptr.vmem [resolvable:$true] %s34
      %40 = dma.hbm_to_vmem [thread:$0]  %s2, 4096, %s35, [#allocation7], 128, 128, 8
    $region13: #{tpu_custom_call.1} parent=1 // pred_fallthru
      _
    // Predicated region
    $region14: #{tpu_custom_call.1} parent=1 // pred_check
      _
    $region15: #{tpu_custom_call.1} parent=1 // pred_check_branch
      %42 = sbr.rel (0) target = $region17
    $region16: #{tpu_custom_call.1} parent=1 // pred_region
      %43 = dma.done [#allocation4], 4096
    $region17: #{tpu_custom_call.1} parent=1 // pred_fallthru
      _
    // Predicated region
    $region18: #{tpu_custom_call.1} parent=1 // pred_check
      _
    $region19: #{tpu_custom_call.1} parent=1 // pred_check_branch
      %45 = sbr.rel (0) target = $region21
    $region20: #{tpu_custom_call.1} parent=1 // pred_region
      %46 = dma.done [#allocation7], 4096
    $region21: #{tpu_custom_call.1} parent=1 // pred_fallthru
      _
    %s47 = sld [smem:[#allocation2]]
    %v48 = vld [vmem:[#allocation6] sm:$0xff]
    %v49 = vld [vmem:[#allocation6 + $0x8] sm:$0xff]
    %v50 = vld [vmem:[#allocation6 + $0x10] sm:$0xff]
    %v51 = vld [vmem:[#allocation6 + $0x18] sm:$0xff]
    %v52 = vld [vmem:[#allocation6 + $0x20] sm:$0xff]
    %v53 = vld [vmem:[#allocation6 + $0x28] sm:$0xff]
    %v54 = vld [vmem:[#allocation6 + $0x30] sm:$0xff]
    %v55 = vld [vmem:[#allocation6 + $0x38] sm:$0xff]
    %v56 = vld [vmem:[#allocation6 + $0x40] sm:$0xff]
    %v57 = vld [vmem:[#allocation6 + $0x48] sm:$0xff]
    %v58 = vld [vmem:[#allocation6 + $0x50] sm:$0xff]
    %v59 = vld [vmem:[#allocation6 + $0x58] sm:$0xff]
    %v60 = vld [vmem:[#allocation6 + $0x60] sm:$0xff]
    %v61 = vld [vmem:[#allocation6 + $0x68] sm:$0xff]
    %v62 = vld [vmem:[#allocation6 + $0x70] sm:$0xff]
    %v63 = vld [vmem:[#allocation6 + $0x78] sm:$0xff]
    %v64 = vld [vmem:[#allocation6 + $0x80] sm:$0xff]
    %v65 = vld [vmem:[#allocation6 + $0x88] sm:$0xff]
    %v66 = vld [vmem:[#allocation6 + $0x90] sm:$0xff]
    %v67 = vld [vmem:[#allocation6 + $0x98] sm:$0xff]
    %v68 = vld [vmem:[#allocation6 + $0xa0] sm:$0xff]
    %v69 = vld [vmem:[#allocation6 + $0xa8] sm:$0xff]
    %v70 = vld [vmem:[#allocation6 + $0xb0] sm:$0xff]
    %v71 = vld [vmem:[#allocation6 + $0xb8] sm:$0xff]
    %v72 = vld [vmem:[#allocation6 + $0xc0] sm:$0xff]
    %v73 = vld [vmem:[#allocation6 + $0xc8] sm:$0xff]
    %v74 = vld [vmem:[#allocation6 + $0xd0] sm:$0xff]
    %v75 = vld [vmem:[#allocation6 + $0xd8] sm:$0xff]
    %v76 = vld [vmem:[#allocation6 + $0xe0] sm:$0xff]
    %v77 = vld [vmem:[#allocation6 + $0xe8] sm:$0xff]
    %v78 = vld [vmem:[#allocation6 + $0xf0] sm:$0xff]
    %v79 = vld [vmem:[#allocation6 + $0xf8] sm:$0xff]
    %s80 = ssub.f32 0.0, %s47
    %v81 = vstv %s80
    %v82 = vmul.f32 %v81, %v48
    %v83 = vmul.f32 %v81, %v49
    %v84 = vmul.f32 %v81, %v50
    %v85 = vmul.f32 %v81, %v51
    %v86 = vmul.f32 %v81, %v52
    %v87 = vmul.f32 %v81, %v53
    %v88 = vmul.f32 %v81, %v54
    %v89 = vmul.f32 %v81, %v55
    %v90 = vmul.f32 %v81, %v56
    %v91 = vmul.f32 %v81, %v57
    %v92 = vmul.f32 %v81, %v58
    %v93 = vmul.f32 %v81, %v59
    %v94 = vmul.f32 %v81, %v60
    %v95 = vmul.f32 %v81, %v61
    %v96 = vmul.f32 %v81, %v62
    %v97 = vmul.f32 %v81, %v63
    %v98 = vmul.f32 %v81, %v64
    %v99 = vmul.f32 %v81, %v65
    %v100 = vmul.f32 %v81, %v66
    %v101 = vmul.f32 %v81, %v67
    %v102 = vmul.f32 %v81, %v68
    %v103 = vmul.f32 %v81, %v69
    %v104 = vmul.f32 %v81, %v70
    %v105 = vmul.f32 %v81, %v71
    %v106 = vmul.f32 %v81, %v72
    %v107 = vmul.f32 %v81, %v73
    %v108 = vmul.f32 %v81, %v74
    %v109 = vmul.f32 %v81, %v75
    %v110 = vmul.f32 %v81, %v76
    %v111 = vmul.f32 %v81, %v77
    %v112 = vmul.f32 %v81, %v78
    %v113 = vmul.f32 %v81, %v79
    %v114 = vmul.f32 %v82, 1.442695
    %v115 = vpow.pop %v114
    %v116 = vmul.f32 %v83, 1.442695
    %v117 = vpow.pop %v116
    %v118 = vmul.f32 %v84, 1.442695
    %v119 = vpow.pop %v118
    %v120 = vmul.f32 %v85, 1.442695
    %v121 = vpow.pop %v120
    %v122 = vmul.f32 %v86, 1.442695
    %v123 = vpow.pop %v122
    %v124 = vmul.f32 %v87, 1.442695
    %v125 = vpow.pop %v124
    %v126 = vmul.f32 %v88, 1.442695
    %v127 = vpow.pop %v126
    %v128 = vmul.f32 %v89, 1.442695
    %v129 = vpow.pop %v128
    %v130 = vmul.f32 %v90, 1.442695
    %v131 = vpow.pop %v130
    %v132 = vmul.f32 %v91, 1.442695
    %v133 = vpow.pop %v132
    %v134 = vmul.f32 %v92, 1.442695
    %v135 = vpow.pop %v134
    %v136 = vmul.f32 %v93, 1.442695
    %v137 = vpow.pop %v136
    %v138 = vmul.f32 %v94, 1.442695
    %v139 = vpow.pop %v138
    %v140 = vmul.f32 %v95, 1.442695
    %v141 = vpow.pop %v140
    %v142 = vmul.f32 %v96, 1.442695
    %v143 = vpow.pop %v142
    %v144 = vmul.f32 %v97, 1.442695
    %v145 = vpow.pop %v144
    %v146 = vmul.f32 %v98, 1.442695
    %v147 = vpow.pop %v146
    %v148 = vmul.f32 %v99, 1.442695
    %v149 = vpow.pop %v148
    %v150 = vmul.f32 %v100, 1.442695
    %v151 = vpow.pop %v150
    %v152 = vmul.f32 %v101, 1.442695
    %v153 = vpow.pop %v152
    %v154 = vmul.f32 %v102, 1.442695
    %v155 = vpow.pop %v154
    %v156 = vmul.f32 %v103, 1.442695
    %v157 = vpow.pop %v156
    %v158 = vmul.f32 %v104, 1.442695
    %v159 = vpow.pop %v158
    %v160 = vmul.f32 %v105, 1.442695
    %v161 = vpow.pop %v160
    %v162 = vmul.f32 %v106, 1.442695
    %v163 = vpow.pop %v162
    %v164 = vmul.f32 %v107, 1.442695
    %v165 = vpow.pop %v164
    %v166 = vmul.f32 %v108, 1.442695
    %v167 = vpow.pop %v166
    %v168 = vmul.f32 %v109, 1.442695
    %v169 = vpow.pop %v168
    %v170 = vmul.f32 %v110, 1.442695
    %v171 = vpow.pop %v170
    %v172 = vmul.f32 %v111, 1.442695
    %v173 = vpow.pop %v172
    %v174 = vmul.f32 %v112, 1.442695
    %v175 = vpow.pop %v174
    %v176 = vmul.f32 %v113, 1.442695
    %v177 = vpow.pop %v176
    %v178 = vld [vmem:[#allocation3] sm:$0xff]
    %v179 = vld [vmem:[#allocation3 + $0x8] sm:$0xff]
    %v180 = vld [vmem:[#allocation3 + $0x10] sm:$0xff]
    %v181 = vld [vmem:[#allocation3 + $0x18] sm:$0xff]
    %v182 = vld [vmem:[#allocation3 + $0x20] sm:$0xff]
    %v183 = vld [vmem:[#allocation3 + $0x28] sm:$0xff]
    %v184 = vld [vmem:[#allocation3 + $0x30] sm:$0xff]
    %v185 = vld [vmem:[#allocation3 + $0x38] sm:$0xff]
    %v186 = vld [vmem:[#allocation3 + $0x40] sm:$0xff]
    %v187 = vld [vmem:[#allocation3 + $0x48] sm:$0xff]
    %v188 = vld [vmem:[#allocation3 + $0x50] sm:$0xff]
    %v189 = vld [vmem:[#allocation3 + $0x58] sm:$0xff]
    %v190 = vld [vmem:[#allocation3 + $0x60] sm:$0xff]
    %v191 = vld [vmem:[#allocation3 + $0x68] sm:$0xff]
    %v192 = vld [vmem:[#allocation3 + $0x70] sm:$0xff]
    %v193 = vld [vmem:[#allocation3 + $0x78] sm:$0xff]
    %v194 = vld [vmem:[#allocation3 + $0x80] sm:$0xff]
    %v195 = vld [vmem:[#allocation3 + $0x88] sm:$0xff]
    %v196 = vld [vmem:[#allocation3 + $0x90] sm:$0xff]
    %v197 = vld [vmem:[#allocation3 + $0x98] sm:$0xff]
    %v198 = vld [vmem:[#allocation3 + $0xa0] sm:$0xff]
    %v199 = vld [vmem:[#allocation3 + $0xa8] sm:$0xff]
    %v200 = vld [vmem:[#allocation3 + $0xb0] sm:$0xff]
    %v201 = vld [vmem:[#allocation3 + $0xb8] sm:$0xff]
    %v202 = vld [vmem:[#allocation3 + $0xc0] sm:$0xff]
    %v203 = vld [vmem:[#allocation3 + $0xc8] sm:$0xff]
    %v204 = vld [vmem:[#allocation3 + $0xd0] sm:$0xff]
    %v205 = vld [vmem:[#allocation3 + $0xd8] sm:$0xff]
    %v206 = vld [vmem:[#allocation3 + $0xe0] sm:$0xff]
    %v207 = vld [vmem:[#allocation3 + $0xe8] sm:$0xff]
    %v208 = vld [vmem:[#allocation3 + $0xf0] sm:$0xff]
    %v209 = vld [vmem:[#allocation3 + $0xf8] sm:$0xff]
    %v210 = vmul.f32 %v178, %v115
    %v211 = vmul.f32 %v179, %v117
    %v212 = vmul.f32 %v180, %v119
    %v213 = vmul.f32 %v181, %v121
    %v214 = vmul.f32 %v182, %v123
    %v215 = vmul.f32 %v183, %v125
    %v216 = vmul.f32 %v184, %v127
    %v217 = vmul.f32 %v185, %v129
    %v218 = vmul.f32 %v186, %v131
    %v219 = vmul.f32 %v187, %v133
    %v220 = vmul.f32 %v188, %v135
    %v221 = vmul.f32 %v189, %v137
    %v222 = vmul.f32 %v190, %v139
    %v223 = vmul.f32 %v191, %v141
    %v224 = vmul.f32 %v192, %v143
    %v225 = vmul.f32 %v193, %v145
    %v226 = vmul.f32 %v194, %v147
    %v227 = vmul.f32 %v195, %v149
    %v228 = vmul.f32 %v196, %v151
    %v229 = vmul.f32 %v197, %v153
    %v230 = vmul.f32 %v198, %v155
    %v231 = vmul.f32 %v199, %v157
    %v232 = vmul.f32 %v200, %v159
    %v233 = vmul.f32 %v201, %v161
    %v234 = vmul.f32 %v202, %v163
    %v235 = vmul.f32 %v203, %v165
    %v236 = vmul.f32 %v204, %v167
    %v237 = vmul.f32 %v205, %v169
    %v238 = vmul.f32 %v206, %v171
    %v239 = vmul.f32 %v207, %v173
    %v240 = vmul.f32 %v208, %v175
    %v241 = vmul.f32 %v209, %v177
    %v242 = vpack.c.bf16 %v211, %v210
    %v243 = vpack.c.bf16 %v213, %v212
    %v244 = vpack.c.bf16 %v215, %v214
    %v245 = vpack.c.bf16 %v217, %v216
    %v246 = vpack.c.bf16 %v219, %v218
    %v247 = vpack.c.bf16 %v221, %v220
    %v248 = vpack.c.bf16 %v223, %v222
    %v249 = vpack.c.bf16 %v225, %v224
    %v250 = vpack.c.bf16 %v227, %v226
    %v251 = vpack.c.bf16 %v229, %v228
    %v252 = vpack.c.bf16 %v231, %v230
    %v253 = vpack.c.bf16 %v233, %v232
    %v254 = vpack.c.bf16 %v235, %v234
    %v255 = vpack.c.bf16 %v237, %v236
    %v256 = vpack.c.bf16 %v239, %v238
    %v257 = vpack.c.bf16 %v241, %v240
    %v274 = vunpack.c.l.b16 %v242
    %v275 = vunpack.c.h.b16 %v242
    %v276 = vunpack.c.l.b16 %v243
    %v277 = vunpack.c.h.b16 %v243
    %v278 = vunpack.c.l.b16 %v244
    %v279 = vunpack.c.h.b16 %v244
    %v280 = vunpack.c.l.b16 %v245
    %v281 = vunpack.c.h.b16 %v245
    %v282 = vunpack.c.l.b16 %v246
    %v283 = vunpack.c.h.b16 %v246
    %v284 = vunpack.c.l.b16 %v247
    %v285 = vunpack.c.h.b16 %v247
    %v286 = vunpack.c.l.b16 %v248
    %v287 = vunpack.c.h.b16 %v248
    %v288 = vunpack.c.l.b16 %v249
    %v289 = vunpack.c.h.b16 %v249
    %v290 = vunpack.c.l.b16 %v250
    %v291 = vunpack.c.h.b16 %v250
    %v292 = vunpack.c.l.b16 %v251
    %v293 = vunpack.c.h.b16 %v251
    %v294 = vunpack.c.l.b16 %v252
    %v295 = vunpack.c.h.b16 %v252
    %v296 = vunpack.c.l.b16 %v253
    %v297 = vunpack.c.h.b16 %v253
    %v298 = vunpack.c.l.b16 %v254
    %v299 = vunpack.c.h.b16 %v254
    %v300 = vunpack.c.l.b16 %v255
    %v301 = vunpack.c.h.b16 %v255
    %v302 = vunpack.c.l.b16 %v256
    %v303 = vunpack.c.h.b16 %v256
    %v304 = vunpack.c.l.b16 %v257
    %v305 = vunpack.c.h.b16 %v257
    %v306 = vpack.c.b16 %v274, %v274
    %v307 = vpack.c.b16 %v275, %v275
    %v308 = vpack.c.b16 %v276, %v276
    %v309 = vpack.c.b16 %v277, %v277
    %v310 = vpack.c.b16 %v278, %v278
    %v311 = vpack.c.b16 %v279, %v279
    %v312 = vpack.c.b16 %v280, %v280
    %v313 = vpack.c.b16 %v281, %v281
    %v314 = vpack.c.b16 %v282, %v282
    %v315 = vpack.c.b16 %v283, %v283
    %v316 = vpack.c.b16 %v284, %v284
    %v317 = vpack.c.b16 %v285, %v285
    %v318 = vpack.c.b16 %v286, %v286
    %v319 = vpack.c.b16 %v287, %v287
    %v320 = vpack.c.b16 %v288, %v288
    %v321 = vpack.c.b16 %v289, %v289
    %v322 = vpack.c.b16 %v290, %v290
    %v323 = vpack.c.b16 %v291, %v291
    %v324 = vpack.c.b16 %v292, %v292
    %v325 = vpack.c.b16 %v293, %v293
    %v326 = vpack.c.b16 %v294, %v294
    %v327 = vpack.c.b16 %v295, %v295
    %v328 = vpack.c.b16 %v296, %v296
    %v329 = vpack.c.b16 %v297, %v297
    %v330 = vpack.c.b16 %v298, %v298
    %v331 = vpack.c.b16 %v299, %v299
    %v332 = vpack.c.b16 %v300, %v300
    %v333 = vpack.c.b16 %v301, %v301
    %v334 = vpack.c.b16 %v302, %v302
    %v335 = vpack.c.b16 %v303, %v303
    %v336 = vpack.c.b16 %v304, %v304
    %v337 = vpack.c.b16 %v305, %v305
    %370 = vst [vmem:[#allocation8] sm:$0xf] %v306
    %371 = vst [vmem:[#allocation8 + $0x4] sm:$0xf] %v307
    %372 = vst [vmem:[#allocation8 + $0x8] sm:$0xf] %v308
    %373 = vst [vmem:[#allocation8 + $0xc] sm:$0xf] %v309
    %374 = vst [vmem:[#allocation8 + $0x10] sm:$0xf] %v310
    %375 = vst [vmem:[#allocation8 + $0x14] sm:$0xf] %v311
    %376 = vst [vmem:[#allocation8 + $0x18] sm:$0xf] %v312
    %377 = vst [vmem:[#allocation8 + $0x1c] sm:$0xf] %v313
    %378 = vst [vmem:[#allocation8 + $0x20] sm:$0xf] %v314
    %379 = vst [vmem:[#allocation8 + $0x24] sm:$0xf] %v315
    %380 = vst [vmem:[#allocation8 + $0x28] sm:$0xf] %v316
    %381 = vst [vmem:[#allocation8 + $0x2c] sm:$0xf] %v317
    %382 = vst [vmem:[#allocation8 + $0x30] sm:$0xf] %v318
    %383 = vst [vmem:[#allocation8 + $0x34] sm:$0xf] %v319
    %384 = vst [vmem:[#allocation8 + $0x38] sm:$0xf] %v320
    %385 = vst [vmem:[#allocation8 + $0x3c] sm:$0xf] %v321
    %386 = vst [vmem:[#allocation8 + $0x40] sm:$0xf] %v322
    %387 = vst [vmem:[#allocation8 + $0x44] sm:$0xf] %v323
    %388 = vst [vmem:[#allocation8 + $0x48] sm:$0xf] %v324
    %389 = vst [vmem:[#allocation8 + $0x4c] sm:$0xf] %v325
    %390 = vst [vmem:[#allocation8 + $0x50] sm:$0xf] %v326
    %391 = vst [vmem:[#allocation8 + $0x54] sm:$0xf] %v327
    %392 = vst [vmem:[#allocation8 + $0x58] sm:$0xf] %v328
    %393 = vst [vmem:[#allocation8 + $0x5c] sm:$0xf] %v329
    %394 = vst [vmem:[#allocation8 + $0x60] sm:$0xf] %v330
    %395 = vst [vmem:[#allocation8 + $0x64] sm:$0xf] %v331
    %396 = vst [vmem:[#allocation8 + $0x68] sm:$0xf] %v332
    %397 = vst [vmem:[#allocation8 + $0x6c] sm:$0xf] %v333
    %398 = vst [vmem:[#allocation8 + $0x70] sm:$0xf] %v334
    %399 = vst [vmem:[#allocation8 + $0x74] sm:$0xf] %v335
    %400 = vst [vmem:[#allocation8 + $0x78] sm:$0xf] %v336
    %401 = vst [vmem:[#allocation8 + $0x7c] sm:$0xf] %v337
    %v402 = vmul.f32 %v48, %v115
    %v403 = vmul.f32 %v49, %v117
    %v404 = vmul.f32 %v50, %v119
    %v405 = vmul.f32 %v51, %v121
    %v406 = vmul.f32 %v52, %v123
    %v407 = vmul.f32 %v53, %v125
    %v408 = vmul.f32 %v54, %v127
    %v409 = vmul.f32 %v55, %v129
    %v410 = vmul.f32 %v56, %v131
    %v411 = vmul.f32 %v57, %v133
    %v412 = vmul.f32 %v58, %v135
    %v413 = vmul.f32 %v59, %v137
    %v414 = vmul.f32 %v60, %v139
    %v415 = vmul.f32 %v61, %v141
    %v416 = vmul.f32 %v62, %v143
    %v417 = vmul.f32 %v63, %v145
    %v418 = vmul.f32 %v64, %v147
    %v419 = vmul.f32 %v65, %v149
    %v420 = vmul.f32 %v66, %v151
    %v421 = vmul.f32 %v67, %v153
    %v422 = vmul.f32 %v68, %v155
    %v423 = vmul.f32 %v69, %v157
    %v424 = vmul.f32 %v70, %v159
    %v425 = vmul.f32 %v71, %v161
    %v426 = vmul.f32 %v72, %v163
    %v427 = vmul.f32 %v73, %v165
    %v428 = vmul.f32 %v74, %v167
    %v429 = vmul.f32 %v75, %v169
    %v430 = vmul.f32 %v76, %v171
    %v431 = vmul.f32 %v77, %v173
    %v432 = vmul.f32 %v78, %v175
    %v433 = vmul.f32 %v79, %v177
    %v434 = vmul.f32 %v402, %v115
    %v435 = vmul.f32 %v403, %v117
    %v436 = vmul.f32 %v404, %v119
    %v437 = vmul.f32 %v405, %v121
    %v438 = vmul.f32 %v406, %v123
    %v439 = vmul.f32 %v407, %v125
    %v440 = vmul.f32 %v408, %v127
    %v441 = vmul.f32 %v409, %v129
    %v442 = vmul.f32 %v410, %v131
    %v443 = vmul.f32 %v411, %v133
    %v444 = vmul.f32 %v412, %v135
    %v445 = vmul.f32 %v413, %v137
    %v446 = vmul.f32 %v414, %v139
    %v447 = vmul.f32 %v415, %v141
    %v448 = vmul.f32 %v416, %v143
    %v449 = vmul.f32 %v417, %v145
    %v450 = vmul.f32 %v418, %v147
    %v451 = vmul.f32 %v419, %v149
    %v452 = vmul.f32 %v420, %v151
    %v453 = vmul.f32 %v421, %v153
    %v454 = vmul.f32 %v422, %v155
    %v455 = vmul.f32 %v423, %v157
    %v456 = vmul.f32 %v424, %v159
    %v457 = vmul.f32 %v425, %v161
    %v458 = vmul.f32 %v426, %v163
    %v459 = vmul.f32 %v427, %v165
    %v460 = vmul.f32 %v428, %v167
    %v461 = vmul.f32 %v429, %v169
    %v462 = vmul.f32 %v430, %v171
    %v463 = vmul.f32 %v431, %v173
    %v464 = vmul.f32 %v432, %v175
    %v465 = vmul.f32 %v433, %v177
    %v466 = vpack.c.bf16 %v435, %v434
    %v467 = vpack.c.bf16 %v437, %v436
    %v468 = vpack.c.bf16 %v439, %v438
    %v469 = vpack.c.bf16 %v441, %v440
    %v470 = vpack.c.bf16 %v443, %v442
    %v471 = vpack.c.bf16 %v445, %v444
    %v472 = vpack.c.bf16 %v447, %v446
    %v473 = vpack.c.bf16 %v449, %v448
    %v474 = vpack.c.bf16 %v451, %v450
    %v475 = vpack.c.bf16 %v453, %v452
    %v476 = vpack.c.bf16 %v455, %v454
    %v477 = vpack.c.bf16 %v457, %v456
    %v478 = vpack.c.bf16 %v459, %v458
    %v479 = vpack.c.bf16 %v461, %v460
    %v480 = vpack.c.bf16 %v463, %v462
    %v481 = vpack.c.bf16 %v465, %v464
    %v498 = vunpack.c.l.b16 %v466
    %v499 = vunpack.c.h.b16 %v466
    %v500 = vunpack.c.l.b16 %v467
    %v501 = vunpack.c.h.b16 %v467
    %v502 = vunpack.c.l.b16 %v468
    %v503 = vunpack.c.h.b16 %v468
    %v504 = vunpack.c.l.b16 %v469
    %v505 = vunpack.c.h.b16 %v469
    %v506 = vunpack.c.l.b16 %v470
    %v507 = vunpack.c.h.b16 %v470
    %v508 = vunpack.c.l.b16 %v471
    %v509 = vunpack.c.h.b16 %v471
    %v510 = vunpack.c.l.b16 %v472
    %v511 = vunpack.c.h.b16 %v472
    %v512 = vunpack.c.l.b16 %v473
    %v513 = vunpack.c.h.b16 %v473
    %v514 = vunpack.c.l.b16 %v474
    %v515 = vunpack.c.h.b16 %v474
    %v516 = vunpack.c.l.b16 %v475
    %v517 = vunpack.c.h.b16 %v475
    %v518 = vunpack.c.l.b16 %v476
    %v519 = vunpack.c.h.b16 %v476
    %v520 = vunpack.c.l.b16 %v477
    %v521 = vunpack.c.h.b16 %v477
    %v522 = vunpack.c.l.b16 %v478
    %v523 = vunpack.c.h.b16 %v478
    %v524 = vunpack.c.l.b16 %v479
    %v525 = vunpack.c.h.b16 %v479
    %v526 = vunpack.c.l.b16 %v480
    %v527 = vunpack.c.h.b16 %v480
    %v528 = vunpack.c.l.b16 %v481
    %v529 = vunpack.c.h.b16 %v481
    %v530 = vpack.c.b16 %v498, %v498
    %v531 = vpack.c.b16 %v499, %v499
    %v532 = vpack.c.b16 %v500, %v500
    %v533 = vpack.c.b16 %v501, %v501
    %v534 = vpack.c.b16 %v502, %v502
    %v535 = vpack.c.b16 %v503, %v503
    %v536 = vpack.c.b16 %v504, %v504
    %v537 = vpack.c.b16 %v505, %v505
    %v538 = vpack.c.b16 %v506, %v506
    %v539 = vpack.c.b16 %v507, %v507
    %v540 = vpack.c.b16 %v508, %v508
    %v541 = vpack.c.b16 %v509, %v509
    %v542 = vpack.c.b16 %v510, %v510
    %v543 = vpack.c.b16 %v511, %v511
    %v544 = vpack.c.b16 %v512, %v512
    %v545 = vpack.c.b16 %v513, %v513
    %v546 = vpack.c.b16 %v514, %v514
    %v547 = vpack.c.b16 %v515, %v515
    %v548 = vpack.c.b16 %v516, %v516
    %v549 = vpack.c.b16 %v517, %v517
    %v550 = vpack.c.b16 %v518, %v518
    %v551 = vpack.c.b16 %v519, %v519
    %v552 = vpack.c.b16 %v520, %v520
    %v553 = vpack.c.b16 %v521, %v521
    %v554 = vpack.c.b16 %v522, %v522
    %v555 = vpack.c.b16 %v523, %v523
    %v556 = vpack.c.b16 %v524, %v524
    %v557 = vpack.c.b16 %v525, %v525
    %v558 = vpack.c.b16 %v526, %v526
    %v559 = vpack.c.b16 %v527, %v527
    %v560 = vpack.c.b16 %v528, %v528
    %v561 = vpack.c.b16 %v529, %v529
    %594 = vst [vmem:[#allocation9] sm:$0xf] %v530
    %595 = vst [vmem:[#allocation9 + $0x4] sm:$0xf] %v531
    %596 = vst [vmem:[#allocation9 + $0x8] sm:$0xf] %v532
    %597 = vst [vmem:[#allocation9 + $0xc] sm:$0xf] %v533
    %598 = vst [vmem:[#allocation9 + $0x10] sm:$0xf] %v534
    %599 = vst [vmem:[#allocation9 + $0x14] sm:$0xf] %v535
    %600 = vst [vmem:[#allocation9 + $0x18] sm:$0xf] %v536
    %601 = vst [vmem:[#allocation9 + $0x1c] sm:$0xf] %v537
    %602 = vst [vmem:[#allocation9 + $0x20] sm:$0xf] %v538
    %603 = vst [vmem:[#allocation9 + $0x24] sm:$0xf] %v539
    %604 = vst [vmem:[#allocation9 + $0x28] sm:$0xf] %v540
    %605 = vst [vmem:[#allocation9 + $0x2c] sm:$0xf] %v541
    %606 = vst [vmem:[#allocation9 + $0x30] sm:$0xf] %v542
    %607 = vst [vmem:[#allocation9 + $0x34] sm:$0xf] %v543
    %608 = vst [vmem:[#allocation9 + $0x38] sm:$0xf] %v544
    %609 = vst [vmem:[#allocation9 + $0x3c] sm:$0xf] %v545
    %610 = vst [vmem:[#allocation9 + $0x40] sm:$0xf] %v546
    %611 = vst [vmem:[#allocation9 + $0x44] sm:$0xf] %v547
    %612 = vst [vmem:[#allocation9 + $0x48] sm:$0xf] %v548
    %613 = vst [vmem:[#allocation9 + $0x4c] sm:$0xf] %v549
    %614 = vst [vmem:[#allocation9 + $0x50] sm:$0xf] %v550
    %615 = vst [vmem:[#allocation9 + $0x54] sm:$0xf] %v551
    %616 = vst [vmem:[#allocation9 + $0x58] sm:$0xf] %v552
    %617 = vst [vmem:[#allocation9 + $0x5c] sm:$0xf] %v553
    %618 = vst [vmem:[#allocation9 + $0x60] sm:$0xf] %v554
    %619 = vst [vmem:[#allocation9 + $0x64] sm:$0xf] %v555
    %620 = vst [vmem:[#allocation9 + $0x68] sm:$0xf] %v556
    %621 = vst [vmem:[#allocation9 + $0x6c] sm:$0xf] %v557
    %622 = vst [vmem:[#allocation9 + $0x70] sm:$0xf] %v558
    %623 = vst [vmem:[#allocation9 + $0x74] sm:$0xf] %v559
    %624 = vst [vmem:[#allocation9 + $0x78] sm:$0xf] %v560
    %625 = vst [vmem:[#allocation9 + $0x7c] sm:$0xf] %v561
    // Predicated region
    $region22: #{tpu_custom_call.1} parent=1 // pred_check
      _
    $region23: #{tpu_custom_call.1} parent=1 // pred_check_branch
      %627 = sbr.rel (0) target = $region25
    $region24: #{tpu_custom_call.1} parent=1 // pred_region
      %s629 = ssub.s32 2048, 2048
      %630 = vsyncadd [#allocation5], %s629
      %s631 = sshll.u32 [#allocation8], 4
      %s632 = int_to_ptr.vmem [resolvable:$true] %s631
      %637 = dma.vmem_to_hbm [thread:$0]  %s632, 2048, %s3, [#allocation5], 64, 64, 4
    $region25: #{tpu_custom_call.1} parent=1 // pred_fallthru
      _
    // Predicated region
    $region26: #{tpu_custom_call.1} parent=1 // pred_check
      _
    $region27: #{tpu_custom_call.1} parent=1 // pred_check_branch
      %639 = sbr.rel (0) target = $region29
    $region28: #{tpu_custom_call.1} parent=1 // pred_region
      %s641 = ssub.s32 2048, 2048
      %642 = vsyncadd [#allocation10], %s641
      %s643 = sshll.u32 [#allocation9], 4
      %s644 = int_to_ptr.vmem [resolvable:$true] %s643
      %649 = dma.vmem_to_hbm [thread:$0]  %s644, 2048, %s4, [#allocation10], 64, 64, 4
    $region29: #{tpu_custom_call.1} parent=1 // pred_fallthru
      _
    // Predicated region
    $region30: #{tpu_custom_call.1} parent=1 // pred_check
      _
    $region31: #{tpu_custom_call.1} parent=1 // pred_check_branch
      %651 = sbr.rel (0) target = $region33
    $region32: #{tpu_custom_call.1} parent=1 // pred_region
      %652 = dma.done [#allocation5], 2048
    $region33: #{tpu_custom_call.1} parent=1 // pred_fallthru
      _
    // Predicated region
    $region34: #{tpu_custom_call.1} parent=1 // pred_check
      _
    $region35: #{tpu_custom_call.1} parent=1 // pred_check_branch
      %654 = sbr.rel (0) target = $region37
    $region36: #{tpu_custom_call.1} parent=1 // pred_region
      %655 = dma.done [#allocation10], 2048
    $region37: #{tpu_custom_call.1} parent=1 // pred_fallthru
      _
    %656 = vsyncpa [#allocation4], 1
    %657 = vsyncpa [#allocation7], 1
    %658 = vsyncpa [#allocation5], 1
    %659 = vsyncpa [#allocation10], 1

</llo_original>
